<compile_context>
chip_gen: v5e
topology: v5e:2x2
jax: 0.10.0
libtpu: 0.0.40
codegen_flags: <defaults>
</compile_context>

<pallas_src>
import functools

import jax
import jax.numpy as jnp
from jax import lax
from jax.experimental import pallas as pl
from jax.experimental.pallas import tpu as pltpu


def _round_up(x, m):
    return ((x + m - 1) // m) * m


def _dce_kernel(labels_ref, preds_ref,
                tp_ref, cnt_ref, psum_ref, lse_ref, valid_ref,
                *, num_classes, ignore_label, hw, thw, n_t, needs_mask):
    """Grid = (B, S, n_t). One step reduces one (C, thw) tile of one (batch, split).

    labels_ref : (1, thw)  uint8/int32  integer labels (values in [0,C) or ignore)
    preds_ref  : (C, thw)  float        per-class predictions / logits
    tp_ref     : (C, 1) f32  resident accumulator: sum(onehot * preds)
    cnt_ref    : (C, 1) f32  resident accumulator: per-class pixel count
    psum_ref   : (C, 1) f32  resident accumulator: per-class sum of preds
    lse_ref    : (1, 1) f32  resident accumulator: sum of logsumexp over valid pixels
    valid_ref  : (1, 1) f32  resident accumulator: valid pixel count
    """
    t = pl.program_id(2)

    @pl.when(t == 0)
    def _init():
        tp_ref[...] = jnp.zeros_like(tp_ref)
        cnt_ref[...] = jnp.zeros_like(cnt_ref)
        psum_ref[...] = jnp.zeros_like(psum_ref)
        lse_ref[...] = jnp.zeros_like(lse_ref)
        valid_ref[...] = jnp.zeros_like(valid_ref)

    labels = labels_ref[...].astype(jnp.int32)           # (1, thw)
    preds = preds_ref[...].astype(jnp.float32)           # (C, thw), f32 accumulation

    if needs_mask:
        # Ragged / over-extent tile: the DMA'd out-of-bounds region is undefined
        # (possibly NaN/inf) -> force preds to 0 and labels to ignore BEFORE any
        # max/exp so nothing can propagate. On fully in-bounds tiles the mask is
        # all-true and this is ~3 cheap VPU ops per element.
        s = pl.program_id(1)
        off = (s * n_t + t) * thw                         # global pixel offset (unclamped)
        lane = lax.broadcasted_iota(jnp.int32, (1, thw), 1)
        inb = lane < (hw - off)                           # (1, thw) bool
        labels = jnp.where(inb, labels, ignore_label)
        preds = jnp.where(inb, preds, 0.0)

    cls = lax.broadcasted_iota(jnp.int32, (num_classes, 1), 0)   # (C, 1)
    eq = cls == labels                                           # (C, thw) bool
    # NOTE: requires labels in [0, C) for real pixels and ignore_label >= C
    # (true for the default 255), so ignored pixels never match a class.

    # Dice partials. fn/fp are recovered algebraically in the wrapper:
    #   fn = cnt - tp, fp = psum - tp.
    tp_ref[...] += jnp.sum(jnp.where(eq, preds, 0.0), axis=1, keepdims=True)
    cnt_ref[...] += jnp.sum(eq.astype(jnp.float32), axis=1, keepdims=True)
    psum_ref[...] += jnp.sum(preds, axis=1, keepdims=True)

    # Cross-entropy partials: stable logsumexp over classes, masked on valid labels.
    valid = labels != ignore_label                               # (1, thw) bool
    m = jnp.max(preds, axis=0, keepdims=True)                    # (1, thw)
    lse = m + jnp.log(jnp.sum(jnp.exp(preds - m), axis=0, keepdims=True))
    lse_ref[...] += jnp.sum(jnp.where(valid, lse, 0.0), axis=1, keepdims=True)
    valid_ref[...] += jnp.sum(valid.astype(jnp.float32), axis=1, keepdims=True)


def _choose_hw_tile(num_classes, hw, preds_itemsize, label_itemsize):
    # Keep double-buffered (preds + labels) tiles under ~8 MiB so the 2-deep
    # pipeline fits v7x's 32 MiB scoped / 64 MiB physical VMEM (v5e/v6e have more).
    budget = 8 * 1024 * 1024
    bytes_per_pixel = 2 * (num_classes * preds_itemsize + label_itemsize)
    max_thw = max(128, (budget // bytes_per_pixel) // 128 * 128)
    return min(max_thw, _round_up(hw, 128))


def dce_loss_single(preds, labels, *, delta=0.5, ignore_label=255, max_thw=None):
    """preds: (B, C, H, W) float logits; labels: (B, H, W) int in [0,C) U {ignore_label}."""
    B, C, H, W = preds.shape
    HW = H * W

    # Labels travel as uint8 when possible (cuts label HBM traffic 4x vs int32,
    # which matters on the HBM-bound v5e path at small C). Upcast in-kernel.
    if C <= 255 and 0 <= ignore_label <= 255:
        lbl_dtype = jnp.uint8
    else:
        lbl_dtype = jnp.int32
    preds_flat = preds.reshape(B, C, HW)                       # metadata reshape, no copy
    labels_flat = labels.reshape(B, 1, HW).astype(lbl_dtype)

    thw = _choose_hw_tile(C, HW, jnp.dtype(preds.dtype).itemsize,
                          jnp.dtype(lbl_dtype).itemsize)
    if max_thw is not None:
        thw = min(thw, max(128, _round_up(max_thw, 128)))
    n_hw = pl.cdiv(HW, thw)

    # v7x megacore: if the batch axis alone cannot keep/balance 2 TensorCores,
    # split the spatial tiles across a second "parallel" axis; the per-(b, s)
    # outputs are raw partial sums, so summing over s in the wrapper is exact.
    S = 2 if (B % 2 == 1 and n_hw >= 2) else 1
    n_t = pl.cdiv(n_hw, S)
    needs_mask = (S * n_t * thw) != HW

    def hw_idx(s, t):
        # Clamp so the DMA never starts past the end of the spatial axis; fully
        # over-extent tiles are masked to zero-contribution inside the kernel.
        return jnp.minimum(s * n_t + t, n_hw - 1)

    kernel = functools.partial(
        _dce_kernel, num_classes=C, ignore_label=int(ignore_label),
        hw=HW, thw=thw, n_t=n_t, needs_mask=needs_mask)

    cls_out = jax.ShapeDtypeStruct((B, S, C, 1), jnp.float32)
    scl_out = jax.ShapeDtypeStruct((B, S, 1, 1), jnp.float32)
    cls_spec = pl.BlockSpec((None, None, C, 1), lambda b, s, t: (b, s, 0, 0))
    scl_spec = pl.BlockSpec((None, None, 1, 1), lambda b, s, t: (b, s, 0, 0))

    tp_b, cnt_b, psum_b, lse_b, valid_b = pl.pallas_call(
        kernel,
        out_shape=(cls_out, cls_out, cls_out, scl_out, scl_out),
        grid_spec=pltpu.PrefetchScalarGridSpec(
            num_scalar_prefetch=0,
            grid=(B, S, n_t),
            in_specs=[
                pl.BlockSpec((None, 1, thw), lambda b, s, t: (b, 0, hw_idx(s, t))),   # labels
                pl.BlockSpec((None, C, thw), lambda b, s, t: (b, 0, hw_idx(s, t))),   # preds
            ],
            out_specs=(cls_spec, cls_spec, cls_spec, scl_spec, scl_spec),
        ),
        compiler_params=pltpu.CompilerParams(
            dimension_semantics=("parallel", "parallel", "arbitrary"),
            vmem_limit_bytes=32 * 1024 * 1024,
        ),
    )(labels_flat, preds_flat)

    # Tiny epilogue on (B, C)-sized arrays in plain XLA.
    tp = jnp.sum(tp_b, axis=(1, 3))          # (B, C)
    cnt = jnp.sum(cnt_b, axis=(1, 3))
    psum = jnp.sum(psum_b, axis=(1, 3))
    eps = 1e-06
    # tp + delta*(cnt - tp) + (1-delta)*(psum - tp) == delta*cnt + (1-delta)*psum
    dice_score = (tp + eps) / (delta * cnt + (1.0 - delta) * psum + eps)
    dice = jnp.mean(jnp.sum(1.0 - dice_score, axis=-1) / C)
    # sum_p(-log_softmax(preds)[label_p]) over valid pixels == sum lse - sum_c tp_c.
    ce = (jnp.sum(lse_b) - jnp.sum(tp)) / jnp.sum(valid_b)   # NaN if zero valid pixels (matches torch)
    return dice + ce


def dce_loss(preds, labels, *, delta=0.5, ignore_label=255, aux_weights=(1.0, 0.4, 0.4)):
    """Mirrors DCE.forward: `preds` may be a tuple/list of aux head outputs."""
    # TODO(synk): per-class CE weight tensor (criterion weight=...) not implemented;
    # only the default weight=None path of nn.CrossEntropyLoss is supported.
    if isinstance(preds, (tuple, list)):
        return sum(w * dce_loss_single(p, labels, delta=delta, ignore_label=ignore_label)
                   for p, w in zip(preds, aux_weights))
    return dce_loss_single(preds, labels, delta=delta, ignore_label=ignore_label)


def _dce_loss_ref(preds, labels, *, delta=0.5, ignore_label=255):
    """Pure-JAX reference reproducing DCE._forward (Dice + CrossEntropy)."""
    preds = preds.astype(jnp.float32)
    num_classes = preds.shape[1]
    onehot = jax.nn.one_hot(labels, num_classes, dtype=preds.dtype)       # (B,H,W,C)
    onehot = jnp.transpose(onehot, (0, 3, 1, 2))                          # (B,C,H,W)
    tp = jnp.sum(onehot * preds, axis=(2, 3))
    fn = jnp.sum(onehot * (1 - preds), axis=(2, 3))
    fp = jnp.sum((1 - onehot) * preds, axis=(2, 3))
    dice_score = (tp + 1e-06) / (tp + delta * fn + (1 - delta) * fp + 1e-06)
    dice = jnp.mean(jnp.sum(1 - dice_score, axis=-1) / num_classes)
    # nn.CrossEntropyLoss(weight=None, ignore_index=ignore_label), mean reduction.
    logp = jax.nn.log_softmax(preds, axis=1)
    valid = labels != ignore_label
    safe_labels = jnp.where(valid, labels, 0)
    nll = -jnp.take_along_axis(logp, safe_labels[:, None], axis=1)[:, 0]  # (B,H,W)
    ce = jnp.sum(nll * valid) / jnp.sum(valid)
    return dice + ce


if __name__ == "__main__":
    key = jax.random.PRNGKey(0)
    k_logits, k_labels, k_logits2, k_labels2 = jax.random.split(key, 4)

    B, C, H, W = 2, 4, 16, 16
    logits = jax.random.normal(k_logits, (B, C, H, W), dtype=jnp.float32)
    labels = jax.random.randint(k_labels, (B, H, W), 0, C, dtype=jnp.int32)

    # f32 path
    loss = jax.block_until_ready(dce_loss(logits, labels, delta=0.5))
    ref = jax.block_until_ready(_dce_loss_ref(logits, labels, delta=0.5))
    assert jnp.allclose(loss, ref, rtol=1e-4, atol=1e-4), (loss, ref)

    # bf16 input-DMA path (half the preds HBM traffic; in-kernel accumulation is f32).
    logits_bf16 = logits.astype(jnp.bfloat16)
    loss16 = jax.block_until_ready(dce_loss(logits_bf16, labels, delta=0.5))
    ref16 = jax.block_until_ready(
        _dce_loss_ref(logits_bf16.astype(jnp.float32), labels, delta=0.5))
    assert jnp.allclose(loss16, ref16, rtol=1e-4, atol=1e-4), (loss16, ref16)

    # aux-tuple path (mirrors DCE.forward with a tuple of head outputs).
    aux = (logits, 0.5 * logits)
    loss_aux = jax.block_until_ready(dce_loss(aux, labels, delta=0.5))
    ref_aux = jax.block_until_ready(
        1.0 * _dce_loss_ref(logits, labels, delta=0.5)
        + 0.4 * _dce_loss_ref(0.5 * logits, labels, delta=0.5))
    assert jnp.allclose(loss_aux, ref_aux, rtol=1e-4, atol=1e-4), (loss_aux, ref_aux)

    # Ragged-HW path: B=1 (odd -> S=2 spatial split), HW=400 not a multiple of the
    # forced 128-pixel tile -> exercises in-kernel OOB masking, index clamping,
    # ignore_label handling and uint8 label DMA.
    B2, H2, W2 = 1, 20, 20
    logits2 = jax.random.normal(k_logits2, (B2, C, H2, W2), dtype=jnp.float32)
    labels2 = jax.random.randint(k_labels2, (B2, H2, W2), 0, C, dtype=jnp.int32)
    labels2 = labels2.at[:, :2, :].set(255)    # some ignored pixels
    loss2 = jax.block_until_ready(
        dce_loss_single(logits2, labels2, delta=0.5, ignore_label=255, max_thw=128))
    ref2 = jax.block_until_ready(_dce_loss_ref(logits2, labels2, delta=0.5, ignore_label=255))
    assert jnp.allclose(loss2, ref2, rtol=1e-4, atol=1e-4), (loss2, ref2)

    print("KERNEL_OK")
</pallas_src>

<mosaic_0001>
module attributes {stable_mosaic.version = 11 : i64} {
  func.func @_dce_kernel(%arg0: i32, %arg1: i32, %arg2: i32, %arg3: memref<1x1x256xi8, #tpu.memory_space<vmem>>, %arg4: memref<1x4x256xf32, #tpu.memory_space<vmem>>, %arg5: memref<1x1x4x1xf32, #tpu.memory_space<vmem>>, %arg6: memref<1x1x4x1xf32, #tpu.memory_space<vmem>>, %arg7: memref<1x1x4x1xf32, #tpu.memory_space<vmem>>, %arg8: memref<1x1x1x1xf32, #tpu.memory_space<vmem>>, %arg9: memref<1x1x1x1xf32, #tpu.memory_space<vmem>>) attributes {dimension_semantics = [#tpu.dimension_semantics<parallel>, #tpu.dimension_semantics<parallel>, #tpu.dimension_semantics<arbitrary>], iteration_bounds = array<i64: 2, 1, 1>, scalar_prefetch = 0 : i64, scratch_operands = 0 : i64, tpu.core_type = #tpu.core_type<tc>, window_params = [{transform_indices = @transform_0, window_bounds = array<i64: 1, 1, 256>}, {transform_indices = @transform_1, window_bounds = array<i64: 1, 4, 256>}, {transform_indices = @transform_2, window_bounds = array<i64: 1, 1, 4, 1>}, {transform_indices = @transform_3, window_bounds = array<i64: 1, 1, 4, 1>}, {transform_indices = @transform_4, window_bounds = array<i64: 1, 1, 4, 1>}, {transform_indices = @transform_5, window_bounds = array<i64: 1, 1, 1, 1>}, {transform_indices = @transform_6, window_bounds = array<i64: 1, 1, 1, 1>}]} {
    %c0_i32 = arith.constant 0 : i32
    %0 = arith.cmpi eq, %arg2, %c0_i32 : i32
    %1 = arith.extui %0 : i1 to i32
    %c0_i32_0 = arith.constant 0 : i32
    %2 = arith.cmpi ne, %1, %c0_i32_0 : i32
    scf.if %2 {
      %cst_54 = arith.constant 0.000000e+00 : f32
      %71 = vector.broadcast %cst_54 : f32 to vector<4x1xf32>
      %c0_55 = arith.constant 0 : index
      %c0_56 = arith.constant 0 : index
      %c0_57 = arith.constant 0 : index
      %c0_58 = arith.constant 0 : index
      %72 = vector.load %arg5[%c0_55, %c0_56, %c0_57, %c0_58] : memref<1x1x4x1xf32, #tpu.memory_space<vmem>>, vector<1x1x4x1xf32>
      %73 = vector.shape_cast %72 : vector<1x1x4x1xf32> to vector<4x1xf32>
      %74 = vector.shape_cast %71 : vector<4x1xf32> to vector<1x1x4x1xf32>
      tpu.vector_store %arg5[%c0_55, %c0_56, %c0_57, %c0_58], %74 {strides = array<i32>} : memref<1x1x4x1xf32, #tpu.memory_space<vmem>>, vector<1x1x4x1xf32>,
      %cst_59 = arith.constant 0.000000e+00 : f32
      %75 = vector.broadcast %cst_59 : f32 to vector<4x1xf32>
      %c0_60 = arith.constant 0 : index
      %c0_61 = arith.constant 0 : index
      %c0_62 = arith.constant 0 : index
      %c0_63 = arith.constant 0 : index
      %76 = vector.load %arg6[%c0_60, %c0_61, %c0_62, %c0_63] : memref<1x1x4x1xf32, #tpu.memory_space<vmem>>, vector<1x1x4x1xf32>
      %77 = vector.shape_cast %76 : vector<1x1x4x1xf32> to vector<4x1xf32>
      %78 = vector.shape_cast %75 : vector<4x1xf32> to vector<1x1x4x1xf32>
      tpu.vector_store %arg6[%c0_60, %c0_61, %c0_62, %c0_63], %78 {strides = array<i32>} : memref<1x1x4x1xf32, #tpu.memory_space<vmem>>, vector<1x1x4x1xf32>,
      %cst_64 = arith.constant 0.000000e+00 : f32
      %79 = vector.broadcast %cst_64 : f32 to vector<4x1xf32>
      %c0_65 = arith.constant 0 : index
      %c0_66 = arith.constant 0 : index
      %c0_67 = arith.constant 0 : index
      %c0_68 = arith.constant 0 : index
      %80 = vector.load %arg7[%c0_65, %c0_66, %c0_67, %c0_68] : memref<1x1x4x1xf32, #tpu.memory_space<vmem>>, vector<1x1x4x1xf32>
      %81 = vector.shape_cast %80 : vector<1x1x4x1xf32> to vector<4x1xf32>
      %82 = vector.shape_cast %79 : vector<4x1xf32> to vector<1x1x4x1xf32>
      tpu.vector_store %arg7[%c0_65, %c0_66, %c0_67, %c0_68], %82 {strides = array<i32>} : memref<1x1x4x1xf32, #tpu.memory_space<vmem>>, vector<1x1x4x1xf32>,
      %cst_69 = arith.constant 0.000000e+00 : f32
      %83 = vector.broadcast %cst_69 : f32 to vector<1x1xf32>
      %c0_70 = arith.constant 0 : index
      %c0_71 = arith.constant 0 : index
      %c0_72 = arith.constant 0 : index
      %c0_73 = arith.constant 0 : index
      %84 = vector.load %arg8[%c0_70, %c0_71, %c0_72, %c0_73] : memref<1x1x1x1xf32, #tpu.memory_space<vmem>>, vector<1x1x1x1xf32>
      %85 = vector.shape_cast %84 : vector<1x1x1x1xf32> to vector<1x1xf32>
      %86 = vector.shape_cast %83 : vector<1x1xf32> to vector<1x1x1x1xf32>
      tpu.vector_store %arg8[%c0_70, %c0_71, %c0_72, %c0_73], %86 {strides = array<i32>} : memref<1x1x1x1xf32, #tpu.memory_space<vmem>>, vector<1x1x1x1xf32>,
      %cst_74 = arith.constant 0.000000e+00 : f32
      %87 = vector.broadcast %cst_74 : f32 to vector<1x1xf32>
      %c0_75 = arith.constant 0 : index
      %c0_76 = arith.constant 0 : index
      %c0_77 = arith.constant 0 : index
      %c0_78 = arith.constant 0 : index
      %88 = vector.load %arg9[%c0_75, %c0_76, %c0_77, %c0_78] : memref<1x1x1x1xf32, #tpu.memory_space<vmem>>, vector<1x1x1x1xf32>
      %89 = vector.shape_cast %88 : vector<1x1x1x1xf32> to vector<1x1xf32>
      %90 = vector.shape_cast %87 : vector<1x1xf32> to vector<1x1x1x1xf32>
      tpu.vector_store %arg9[%c0_75, %c0_76, %c0_77, %c0_78], %90 {strides = array<i32>} : memref<1x1x1x1xf32, #tpu.memory_space<vmem>>, vector<1x1x1x1xf32>,
    } else {
    }
    %c0 = arith.constant 0 : index
    %c0_1 = arith.constant 0 : index
    %c0_2 = arith.constant 0 : index
    %3 = vector.load %arg3[%c0, %c0_1, %c0_2] : memref<1x1x256xi8, #tpu.memory_space<vmem>>, vector<1x1x256xi8>
    %4 = vector.shape_cast %3 : vector<1x1x256xi8> to vector<1x256xi8>
    %5 = arith.extui %4 : vector<1x256xi8> to vector<1x256xi32>
    %c0_3 = arith.constant 0 : index
    %c0_4 = arith.constant 0 : index
    %c0_5 = arith.constant 0 : index
    %6 = vector.load %arg4[%c0_3, %c0_4, %c0_5] : memref<1x4x256xf32, #tpu.memory_space<vmem>>, vector<1x4x256xf32>
    %7 = vector.shape_cast %6 : vector<1x4x256xf32> to vector<4x256xf32>
    %8 = tpu.iota {dimensions = array<i32: 0>} : vector<4x1xi32>
    %9 = vector.broadcast %8 : vector<4x1xi32> to vector<4x256xi32>
    %10 = vector.broadcast %5 : vector<1x256xi32> to vector<4x256xi32>
    %11 = arith.cmpi eq, %9, %10 : vector<4x256xi32>
    %c0_6 = arith.constant 0 : index
    %c0_7 = arith.constant 0 : index
    %c0_8 = arith.constant 0 : index
    %c0_9 = arith.constant 0 : index
    %12 = vector.load %arg5[%c0_6, %c0_7, %c0_8, %c0_9] : memref<1x1x4x1xf32, #tpu.memory_space<vmem>>, vector<1x1x4x1xf32>
    %13 = vector.shape_cast %12 : vector<1x1x4x1xf32> to vector<4x1xf32>
    %cst = arith.constant 0.000000e+00 : f32
    %14 = vector.broadcast %cst : f32 to vector<4x256xf32>
    %15 = arith.select %11, %7, %14 : vector<4x256xi1>, vector<4x256xf32>
    %cst_10 = arith.constant dense<0.000000e+00> : vector<4xf32>
    %16 = vector.multi_reduction <add>, %15, %cst_10 [1] : vector<4x256xf32> to vector<4xf32>
    %17 = vector.shape_cast %16 : vector<4xf32> to vector<4x1xf32>
    %18 = arith.addf %13, %17 : vector<4x1xf32>
    %c0_11 = arith.constant 0 : index
    %c0_12 = arith.constant 0 : index
    %c0_13 = arith.constant 0 : index
    %c0_14 = arith.constant 0 : index
    %19 = vector.load %arg5[%c0_11, %c0_12, %c0_13, %c0_14] : memref<1x1x4x1xf32, #tpu.memory_space<vmem>>, vector<1x1x4x1xf32>
    %20 = vector.shape_cast %19 : vector<1x1x4x1xf32> to vector<4x1xf32>
    %21 = vector.shape_cast %18 : vector<4x1xf32> to vector<1x1x4x1xf32>
    tpu.vector_store %arg5[%c0_11, %c0_12, %c0_13, %c0_14], %21 {strides = array<i32>} : memref<1x1x4x1xf32, #tpu.memory_space<vmem>>, vector<1x1x4x1xf32>,
    %c0_15 = arith.constant 0 : index
    %c0_16 = arith.constant 0 : index
    %c0_17 = arith.constant 0 : index
    %c0_18 = arith.constant 0 : index
    %22 = vector.load %arg6[%c0_15, %c0_16, %c0_17, %c0_18] : memref<1x1x4x1xf32, #tpu.memory_space<vmem>>, vector<1x1x4x1xf32>
    %23 = vector.shape_cast %22 : vector<1x1x4x1xf32> to vector<4x1xf32>
    %24 = arith.extui %11 : vector<4x256xi1> to vector<4x256xi32>
    %25 = arith.sitofp %24 : vector<4x256xi32> to vector<4x256xf32>
    %cst_19 = arith.constant dense<0.000000e+00> : vector<4xf32>
    %26 = vector.multi_reduction <add>, %25, %cst_19 [1] : vector<4x256xf32> to vector<4xf32>
    %27 = vector.shape_cast %26 : vector<4xf32> to vector<4x1xf32>
    %28 = arith.addf %23, %27 : vector<4x1xf32>
    %c0_20 = arith.constant 0 : index
    %c0_21 = arith.constant 0 : index
    %c0_22 = arith.constant 0 : index
    %c0_23 = arith.constant 0 : index
    %29 = vector.load %arg6[%c0_20, %c0_21, %c0_22, %c0_23] : memref<1x1x4x1xf32, #tpu.memory_space<vmem>>, vector<1x1x4x1xf32>
    %30 = vector.shape_cast %29 : vector<1x1x4x1xf32> to vector<4x1xf32>
    %31 = vector.shape_cast %28 : vector<4x1xf32> to vector<1x1x4x1xf32>
    tpu.vector_store %arg6[%c0_20, %c0_21, %c0_22, %c0_23], %31 {strides = array<i32>} : memref<1x1x4x1xf32, #tpu.memory_space<vmem>>, vector<1x1x4x1xf32>,
    %c0_24 = arith.constant 0 : index
    %c0_25 = arith.constant 0 : index
    %c0_26 = arith.constant 0 : index
    %c0_27 = arith.constant 0 : index
    %32 = vector.load %arg7[%c0_24, %c0_25, %c0_26, %c0_27] : memref<1x1x4x1xf32, #tpu.memory_space<vmem>>, vector<1x1x4x1xf32>
    %33 = vector.shape_cast %32 : vector<1x1x4x1xf32> to vector<4x1xf32>
    %cst_28 = arith.constant dense<0.000000e+00> : vector<4xf32>
    %34 = vector.multi_reduction <add>, %7, %cst_28 [1] : vector<4x256xf32> to vector<4xf32>
    %35 = vector.shape_cast %34 : vector<4xf32> to vector<4x1xf32>
    %36 = arith.addf %33, %35 : vector<4x1xf32>
    %c0_29 = arith.constant 0 : index
    %c0_30 = arith.constant 0 : index
    %c0_31 = arith.constant 0 : index
    %c0_32 = arith.constant 0 : index
    %37 = vector.load %arg7[%c0_29, %c0_30, %c0_31, %c0_32] : memref<1x1x4x1xf32, #tpu.memory_space<vmem>>, vector<1x1x4x1xf32>
    %38 = vector.shape_cast %37 : vector<1x1x4x1xf32> to vector<4x1xf32>
    %39 = vector.shape_cast %36 : vector<4x1xf32> to vector<1x1x4x1xf32>
    tpu.vector_store %arg7[%c0_29, %c0_30, %c0_31, %c0_32], %39 {strides = array<i32>} : memref<1x1x4x1xf32, #tpu.memory_space<vmem>>, vector<1x1x4x1xf32>,
    %c255_i32 = arith.constant 255 : i32
    %40 = vector.broadcast %c255_i32 : i32 to vector<1x256xi32>
    %41 = arith.cmpi ne, %5, %40 : vector<1x256xi32>
    %cst_33 = arith.constant dense<0xFF800000> : vector<256xf32>
    %42 = vector.multi_reduction <maximumf>, %7, %cst_33 [0] : vector<4x256xf32> to vector<256xf32>
    %43 = vector.shape_cast %42 : vector<256xf32> to vector<1x256xf32>
    %44 = vector.broadcast %43 : vector<1x256xf32> to vector<4x256xf32>
    %45 = arith.subf %7, %44 : vector<4x256xf32>
    %46 = math.exp %45 : vector<4x256xf32>
    %cst_34 = arith.constant dense<0.000000e+00> : vector<256xf32>
    %47 = vector.multi_reduction <add>, %46, %cst_34 [0] : vector<4x256xf32> to vector<256xf32>
    %48 = vector.shape_cast %47 : vector<256xf32> to vector<1x256xf32>
    %49 = math.log %48 : vector<1x256xf32>
    %50 = arith.addf %43, %49 : vector<1x256xf32>
    %c0_35 = arith.constant 0 : index
    %c0_36 = arith.constant 0 : index
    %c0_37 = arith.constant 0 : index
    %c0_38 = arith.constant 0 : index
    %51 = vector.load %arg8[%c0_35, %c0_36, %c0_37, %c0_38] : memref<1x1x1x1xf32, #tpu.memory_space<vmem>>, vector<1x1x1x1xf32>
    %52 = vector.shape_cast %51 : vector<1x1x1x1xf32> to vector<1x1xf32>
    %cst_39 = arith.constant 0.000000e+00 : f32
    %53 = vector.broadcast %cst_39 : f32 to vector<1x256xf32>
    %54 = arith.select %41, %50, %53 : vector<1x256xi1>, vector<1x256xf32>
    %cst_40 = arith.constant dense<0.000000e+00> : vector<1xf32>
    %55 = vector.multi_reduction <add>, %54, %cst_40 [1] : vector<1x256xf32> to vector<1xf32>
    %56 = vector.shape_cast %55 : vector<1xf32> to vector<1x1xf32>
    %57 = arith.addf %52, %56 : vector<1x1xf32>
    %c0_41 = arith.constant 0 : index
    %c0_42 = arith.constant 0 : index
    %c0_43 = arith.constant 0 : index
    %c0_44 = arith.constant 0 : index
    %58 = vector.load %arg8[%c0_41, %c0_42, %c0_43, %c0_44] : memref<1x1x1x1xf32, #tpu.memory_space<vmem>>, vector<1x1x1x1xf32>
    %59 = vector.shape_cast %58 : vector<1x1x1x1xf32> to vector<1x1xf32>
    %60 = vector.shape_cast %57 : vector<1x1xf32> to vector<1x1x1x1xf32>
    tpu.vector_store %arg8[%c0_41, %c0_42, %c0_43, %c0_44], %60 {strides = array<i32>} : memref<1x1x1x1xf32, #tpu.memory_space<vmem>>, vector<1x1x1x1xf32>,
    %c0_45 = arith.constant 0 : index
    %c0_46 = arith.constant 0 : index
    %c0_47 = arith.constant 0 : index
    %c0_48 = arith.constant 0 : index
    %61 = vector.load %arg9[%c0_45, %c0_46, %c0_47, %c0_48] : memref<1x1x1x1xf32, #tpu.memory_space<vmem>>, vector<1x1x1x1xf32>
    %62 = vector.shape_cast %61 : vector<1x1x1x1xf32> to vector<1x1xf32>
    %63 = arith.extui %41 : vector<1x256xi1> to vector<1x256xi32>
    %64 = arith.sitofp %63 : vector<1x256xi32> to vector<1x256xf32>
    %cst_49 = arith.constant dense<0.000000e+00> : vector<1xf32>
    %65 = vector.multi_reduction <add>, %64, %cst_49 [1] : vector<1x256xf32> to vector<1xf32>
    %66 = vector.shape_cast %65 : vector<1xf32> to vector<1x1xf32>
    %67 = arith.addf %62, %66 : vector<1x1xf32>
    %c0_50 = arith.constant 0 : index
    %c0_51 = arith.constant 0 : index
    %c0_52 = arith.constant 0 : index
    %c0_53 = arith.constant 0 : index
    %68 = vector.load %arg9[%c0_50, %c0_51, %c0_52, %c0_53] : memref<1x1x1x1xf32, #tpu.memory_space<vmem>>, vector<1x1x1x1xf32>
    %69 = vector.shape_cast %68 : vector<1x1x1x1xf32> to vector<1x1xf32>
    %70 = vector.shape_cast %67 : vector<1x1xf32> to vector<1x1x1x1xf32>
    tpu.vector_store %arg9[%c0_50, %c0_51, %c0_52, %c0_53], %70 {strides = array<i32>} : memref<1x1x1x1xf32, #tpu.memory_space<vmem>>, vector<1x1x1x1xf32>,
    return
  }
  func.func @transform_0(%arg0: i32, %arg1: i32, %arg2: i32) -> (i32, i32, i32) {
    %c1_i32 = arith.constant 1 : i32
    %0 = arith.muli %arg1, %c1_i32 : i32
    %1 = arith.addi %0, %arg2 : i32
    %c0_i32 = arith.constant 0 : i32
    %2 = arith.minsi %1, %c0_i32 : i32
    %c0_i32_0 = arith.constant 0 : i32
    %c0_i32_1 = arith.constant 0 : i32
    return %arg0, %c0_i32_0, %2 : i32, i32, i32
  }
  func.func @transform_1(%arg0: i32, %arg1: i32, %arg2: i32) -> (i32, i32, i32) {
    %c1_i32 = arith.constant 1 : i32
    %0 = arith.muli %arg1, %c1_i32 : i32
    %1 = arith.addi %0, %arg2 : i32
    %c0_i32 = arith.constant 0 : i32
    %2 = arith.minsi %1, %c0_i32 : i32
    %c0_i32_0 = arith.constant 0 : i32
    %c0_i32_1 = arith.constant 0 : i32
    return %arg0, %c0_i32_0, %2 : i32, i32, i32
  }
  func.func @transform_2(%arg0: i32, %arg1: i32, %arg2: i32) -> (i32, i32, i32, i32) {
    %c0_i32 = arith.constant 0 : i32
    %c0_i32_0 = arith.constant 0 : i32
    %c0_i32_1 = arith.constant 0 : i32
    return %arg0, %arg1, %c0_i32, %c0_i32_0 : i32, i32, i32, i32
  }
  func.func @transform_3(%arg0: i32, %arg1: i32, %arg2: i32) -> (i32, i32, i32, i32) {
    %c0_i32 = arith.constant 0 : i32
    %c0_i32_0 = arith.constant 0 : i32
    %c0_i32_1 = arith.constant 0 : i32
    return %arg0, %arg1, %c0_i32, %c0_i32_0 : i32, i32, i32, i32
  }
  func.func @transform_4(%arg0: i32, %arg1: i32, %arg2: i32) -> (i32, i32, i32, i32) {
    %c0_i32 = arith.constant 0 : i32
    %c0_i32_0 = arith.constant 0 : i32
    %c0_i32_1 = arith.constant 0 : i32
    return %arg0, %arg1, %c0_i32, %c0_i32_0 : i32, i32, i32, i32
  }
  func.func @transform_5(%arg0: i32, %arg1: i32, %arg2: i32) -> (i32, i32, i32, i32) {
    %c0_i32 = arith.constant 0 : i32
    %c0_i32_0 = arith.constant 0 : i32
    %c0_i32_1 = arith.constant 0 : i32
    return %arg0, %arg1, %c0_i32, %c0_i32_0 : i32, i32, i32, i32
  }
  func.func @transform_6(%arg0: i32, %arg1: i32, %arg2: i32) -> (i32, i32, i32, i32) {
    %c0_i32 = arith.constant 0 : i32
    %c0_i32_0 = arith.constant 0 : i32
    %c0_i32_1 = arith.constant 0 : i32
    return %arg0, %arg1, %c0_i32, %c0_i32_0 : i32, i32, i32, i32
  }
}

</mosaic_0001>

<llo_original>
// kernel: tpu_custom_call.1
$region0: #{tpu_custom_call.1}
  #allocation0 [shape = 'u32[]', space=smem, size = 0x4, offset = 0x4, fixed_abs, tag = 'smem constant byte address 0x4 - core index']
  #allocation1 [shape = 'u32[72,128]{1,0:T(1,128)}', space=vmem, size = 0x9000, scoped, tag = 'internal scratch']
  %s0 = inlined_call_operand.vmem [shape: u8[2,1,256], index: 0, kind: input, shape index: {}]
  %s1 = inlined_call_operand.hbm [shape: f32[2,4,256], index: 1, kind: input, shape index: {}]
  %s2 = inlined_call_operand.vmem [shape: f32[2,1,4,1], index: 2, kind: output, shape index: {0}]
  %s3 = inlined_call_operand.vmem [shape: f32[2,1,4,1], index: 3, kind: output, shape index: {1}]
  %s4 = inlined_call_operand.vmem [shape: f32[2,1,4,1], index: 4, kind: output, shape index: {2}]
  %s5 = inlined_call_operand.vmem [shape: f32[2,1,1,1], index: 5, kind: output, shape index: {3}]
  %s6 = inlined_call_operand.vmem [shape: f32[2,1,1,1], index: 6, kind: output, shape index: {4}]
  %7 = xla_tuple %s2, %s3, %s4, %s5, %s6
  %s8 = sld [smem:[#allocation0]]
  $region81: #{tpu_custom_call.1} parent=0
    _
  %s10 = ssub.s32 1, %s8
  %s11 = scalar_select 0, %s10, %s8
  $region1: #{tpu_custom_call.1} parent=0
    #allocation2 [shape = 'u8[8192]{0}', space=vmem, size = 0x2000, scoped, tag = 'input window, operand 1']
    #allocation3 [shape = 's32[2]{0}', space=sflag, size = 0x8, scoped, tag = 'scoped memory for tpu_custom_call.1']
    %12 = vsyncpa [#allocation3], 0
    %s13 = scalar_lea.sflag [#allocation3], 1
    %14 = vsyncpa %s13, 0
    loop: start=0, step=1, limit=4
    $region2: #{tpu_custom_call.1} parent=1 // loop_pre_header
      _
    $region3: #{tpu_custom_call.1} parent=1 // loop_header
      %s16 = sphi 0, %s20
      %p17 = scmp.ge.s32.totalorder %s16, 4
      %s23 = sphi 0, %s42
      %s24 = sphi 0, %s38
      %s25 = sphi 0, %s34
      %s26 = sphi 0, %s23
      %s27 = sphi 0, %s24
      %s28 = sphi 0, %s25
      %s29 = sphi 0, %s26
      %s30 = sphi 0, %s27
      %s31 = sphi 0, %s28
      %s53 = sphi 0, %s55
      %s56 = sphi 0, %s53
      %s57 = sphi 0, %s56
      %s73 = sphi 0, %s57
      %s87 = sphi 0, %s89
      %s90 = sphi 0, %s87
      %s91 = sphi 0, %s90
      %s107 = sphi 0, %s91
      %s115 = sphi 0, %s117
      %s118 = sphi 0, %s115
      %s119 = sphi 0, %s118
      %s135 = sphi 0, %s119
      %s143 = sphi 0, %s145
      %s146 = sphi 0, %s143
      %s147 = sphi 0, %s146
      %s163 = sphi 0, %s147
      %s171 = sphi 0, %s173
      %s174 = sphi 0, %s171
      %s175 = sphi 0, %s174
      %s191 = sphi 0, %s175
      %s199 = sphi 0, %s201
      %s202 = sphi 0, %s199
      %s203 = sphi 0, %s202
      %s219 = sphi 0, %s203
      %s227 = sphi 0, %s229
      %s230 = sphi 0, %s227
      %s231 = sphi 0, %s230
      %s247 = sphi 0, %s231
    $region4: #{tpu_custom_call.1} parent=1 // loop_header_branch
      %19 = sbr.rel (%p17) target = $region8
    $region5: #{tpu_custom_call.1} parent=1 // loop_body
      %s21 = ssub.s32 %s16, 1
      %s22 = ssub.s32 %s16, 2
      %s32 = sadd.s32 1, %s25
      %p33 = scmp.ge.s32.totalorder %s32, 1
      %s34 = scalar_select %p33, 0, %s32
      %s35 = sadd.s32 1, %s24
      %s36 = scalar_select %p33, %s35, %s24
      %p37 = scmp.ge.s32.totalorder %s36, 1
      %s38 = scalar_select %p37, 0, %s36
      %s39 = sadd.s32 1, %s23
      %s40 = scalar_select %p37, %s39, %s23
      %p41 = scmp.ge.s32.totalorder %s40, 2
      %s42 = scalar_select %p41, 0, %s40
      %s43 = sadd.s32 %s24, %s25
      %p44 = scmp.lt.s32.totalorder %s43, 0
      %s45 = scalar_select %p44, %s43, 0
      %s46 = sadd.s32 %s38, %s34
      %p47 = scmp.lt.s32.totalorder %s46, 0
      %s48 = scalar_select %p47, %s46, 0
      %s49 = ssub.s32 %s23, %s42
      %s50 = ssub.s32 %s45, %s48
      %s51 = sor.u32 %s49, %s50
      %p52 = scmp.eq.s32.totalorder %s51, 0
      %s54 = sadd.s32 %s53, 1
      %s55 = scalar_select %p52, %s53, %s54
      %p58 = pneg %p52
      %p59 = scmp.eq.s32.totalorder %s16, 1
      %p60 = por %p58, %p59
      %p61 = scmp.ne.s32.totalorder %s53, %s56
      %p62 = scmp.eq.s32.totalorder %s16, 0
      %p63 = por %p61, %p62
      %p64 = scmp.ne.s32.totalorder %s53, %s56
      %p65 = scmp.eq.s32.totalorder %s21, 1
      %p66 = por %p64, %p65
      %p67 = scmp.ne.s32.totalorder %s56, %s57
      %p68 = scmp.eq.s32.totalorder %s21, 0
      %p69 = por %p67, %p68
      %p70 = scmp.ne.s32.totalorder %s56, %s57
      %p71 = scmp.eq.s32.totalorder %s22, 1
      %p72 = por %p70, %p71
      %p74 = scmp.ne.s32.totalorder %s57, %s73
      %p75 = scmp.eq.s32.totalorder %s22, 0
      %p76 = por %p74, %p75
      %s77 = sadd.s32 %s24, %s25
      %p78 = scmp.lt.s32.totalorder %s77, 0
      %s79 = scalar_select %p78, %s77, 0
      %s80 = sadd.s32 %s38, %s34
      %p81 = scmp.lt.s32.totalorder %s80, 0
      %s82 = scalar_select %p81, %s80, 0
      %s83 = ssub.s32 %s23, %s42
      %s84 = ssub.s32 %s79, %s82
      %s85 = sor.u32 %s83, %s84
      %p86 = scmp.eq.s32.totalorder %s85, 0
      %s88 = sadd.s32 %s87, 1
      %s89 = scalar_select %p86, %s87, %s88
      %p92 = pneg %p86
      %p93 = scmp.eq.s32.totalorder %s16, 1
      %p94 = por %p92, %p93
      %p95 = scmp.ne.s32.totalorder %s87, %s90
      %p96 = scmp.eq.s32.totalorder %s16, 0
      %p97 = por %p95, %p96
      %p98 = scmp.ne.s32.totalorder %s87, %s90
      %p99 = scmp.eq.s32.totalorder %s21, 1
      %p100 = por %p98, %p99
      %p101 = scmp.ne.s32.totalorder %s90, %s91
      %p102 = scmp.eq.s32.totalorder %s21, 0
      %p103 = por %p101, %p102
      %p104 = scmp.ne.s32.totalorder %s90, %s91
      %p105 = scmp.eq.s32.totalorder %s22, 1
      %p106 = por %p104, %p105
      %p108 = scmp.ne.s32.totalorder %s91, %s107
      %p109 = scmp.eq.s32.totalorder %s22, 0
      %p110 = por %p108, %p109
      %s111 = ssub.s32 %s23, %s42
      %s112 = ssub.s32 %s24, %s38
      %s113 = sor.u32 %s111, %s112
      %p114 = scmp.eq.s32.totalorder %s113, 0
      %s116 = sadd.s32 %s115, 1
      %s117 = scalar_select %p114, %s115, %s116
      %p120 = pneg %p114
      %p121 = scmp.eq.s32.totalorder %s16, 1
      %p122 = por %p120, %p121
      %p123 = scmp.ne.s32.totalorder %s115, %s118
      %p124 = scmp.eq.s32.totalorder %s16, 0
      %p125 = por %p123, %p124
      %p126 = scmp.ne.s32.totalorder %s115, %s118
      %p127 = scmp.eq.s32.totalorder %s21, 1
      %p128 = por %p126, %p127
      %p129 = scmp.ne.s32.totalorder %s118, %s119
      %p130 = scmp.eq.s32.totalorder %s21, 0
      %p131 = por %p129, %p130
      %p132 = scmp.ne.s32.totalorder %s118, %s119
      %p133 = scmp.eq.s32.totalorder %s22, 1
      %p134 = por %p132, %p133
      %p136 = scmp.ne.s32.totalorder %s119, %s135
      %p137 = scmp.eq.s32.totalorder %s22, 0
      %p138 = por %p136, %p137
      %s139 = ssub.s32 %s23, %s42
      %s140 = ssub.s32 %s24, %s38
      %s141 = sor.u32 %s139, %s140
      %p142 = scmp.eq.s32.totalorder %s141, 0
      %s144 = sadd.s32 %s143, 1
      %s145 = scalar_select %p142, %s143, %s144
      %p148 = pneg %p142
      %p149 = scmp.eq.s32.totalorder %s16, 1
      %p150 = por %p148, %p149
      %p151 = scmp.ne.s32.totalorder %s143, %s146
      %p152 = scmp.eq.s32.totalorder %s16, 0
      %p153 = por %p151, %p152
      %p154 = scmp.ne.s32.totalorder %s143, %s146
      %p155 = scmp.eq.s32.totalorder %s21, 1
      %p156 = por %p154, %p155
      %p157 = scmp.ne.s32.totalorder %s146, %s147
      %p158 = scmp.eq.s32.totalorder %s21, 0
      %p159 = por %p157, %p158
      %p160 = scmp.ne.s32.totalorder %s146, %s147
      %p161 = scmp.eq.s32.totalorder %s22, 1
      %p162 = por %p160, %p161
      %p164 = scmp.ne.s32.totalorder %s147, %s163
      %p165 = scmp.eq.s32.totalorder %s22, 0
      %p166 = por %p164, %p165
      %s167 = ssub.s32 %s23, %s42
      %s168 = ssub.s32 %s24, %s38
      %s169 = sor.u32 %s167, %s168
      %p170 = scmp.eq.s32.totalorder %s169, 0
      %s172 = sadd.s32 %s171, 1
      %s173 = scalar_select %p170, %s171, %s172
      %p176 = pneg %p170
      %p177 = scmp.eq.s32.totalorder %s16, 1
      %p178 = por %p176, %p177
      %p179 = scmp.ne.s32.totalorder %s171, %s174
      %p180 = scmp.eq.s32.totalorder %s16, 0
      %p181 = por %p179, %p180
      %p182 = scmp.ne.s32.totalorder %s171, %s174
      %p183 = scmp.eq.s32.totalorder %s21, 1
      %p184 = por %p182, %p183
      %p185 = scmp.ne.s32.totalorder %s174, %s175
      %p186 = scmp.eq.s32.totalorder %s21, 0
      %p187 = por %p185, %p186
      %p188 = scmp.ne.s32.totalorder %s174, %s175
      %p189 = scmp.eq.s32.totalorder %s22, 1
      %p190 = por %p188, %p189
      %p192 = scmp.ne.s32.totalorder %s175, %s191
      %p193 = scmp.eq.s32.totalorder %s22, 0
      %p194 = por %p192, %p193
      %s195 = ssub.s32 %s23, %s42
      %s196 = ssub.s32 %s24, %s38
      %s197 = sor.u32 %s195, %s196
      %p198 = scmp.eq.s32.totalorder %s197, 0
      %s200 = sadd.s32 %s199, 1
      %s201 = scalar_select %p198, %s199, %s200
      %p204 = pneg %p198
      %p205 = scmp.eq.s32.totalorder %s16, 1
      %p206 = por %p204, %p205
      %p207 = scmp.ne.s32.totalorder %s199, %s202
      %p208 = scmp.eq.s32.totalorder %s16, 0
      %p209 = por %p207, %p208
      %p210 = scmp.ne.s32.totalorder %s199, %s202
      %p211 = scmp.eq.s32.totalorder %s21, 1
      %p212 = por %p210, %p211
      %p213 = scmp.ne.s32.totalorder %s202, %s203
      %p214 = scmp.eq.s32.totalorder %s21, 0
      %p215 = por %p213, %p214
      %p216 = scmp.ne.s32.totalorder %s202, %s203
      %p217 = scmp.eq.s32.totalorder %s22, 1
      %p218 = por %p216, %p217
      %p220 = scmp.ne.s32.totalorder %s203, %s219
      %p221 = scmp.eq.s32.totalorder %s22, 0
      %p222 = por %p220, %p221
      %s223 = ssub.s32 %s23, %s42
      %s224 = ssub.s32 %s24, %s38
      %s225 = sor.u32 %s223, %s224
      %p226 = scmp.eq.s32.totalorder %s225, 0
      %s228 = sadd.s32 %s227, 1
      %s229 = scalar_select %p226, %s227, %s228
      %p232 = pneg %p226
      %p233 = scmp.eq.s32.totalorder %s16, 1
      %p234 = por %p232, %p233
      %p235 = scmp.ne.s32.totalorder %s227, %s230
      %p236 = scmp.eq.s32.totalorder %s16, 0
      %p237 = por %p235, %p236
      %p238 = scmp.ne.s32.totalorder %s227, %s230
      %p239 = scmp.eq.s32.totalorder %s21, 1
      %p240 = por %p238, %p239
      %p241 = scmp.ne.s32.totalorder %s230, %s231
      %p242 = scmp.eq.s32.totalorder %s21, 0
      %p243 = por %p241, %p242
      %p244 = scmp.ne.s32.totalorder %s230, %s231
      %p245 = scmp.eq.s32.totalorder %s22, 1
      %p246 = por %p244, %p245
      %p248 = scmp.ne.s32.totalorder %s231, %s247
      %p249 = scmp.eq.s32.totalorder %s22, 0
      %p250 = por %p248, %p249
      %p251 = scmp.le.s32.totalorder 1, %s16
      %p252 = scmp.lt.s32.totalorder %s16, 3
      %p253 = pnand %p251, %p252
      %p254 = pneg %p253
      // Predicated region
      $region9: #{tpu_custom_call.1} parent=5 // pred_check
        _
      $region10: #{tpu_custom_call.1} parent=5 // pred_check_branch
        %256 = sbr.rel (%p253) target = $region12
      $region11: #{tpu_custom_call.1} parent=5 // pred_region
        %s257 = ssub.s32 %s16, 1
      $region12: #{tpu_custom_call.1} parent=5 // pred_fallthru
        _
      %p258 = scmp.lt.s32.totalorder %s16, 2
      // Predicated region
      $region13: #{tpu_custom_call.1} parent=5 // pred_check
        %p259 = pneg %p258
      $region14: #{tpu_custom_call.1} parent=5 // pred_check_branch
        %261 = sbr.rel (%p259) target = $region16
      $region15: #{tpu_custom_call.1} parent=5 // pred_region
        // Predicated region
        $region17: #{tpu_custom_call.1} parent=15 // pred_check
          %p262 = pneg %p63
        $region18: #{tpu_custom_call.1} parent=15 // pred_check_branch
          %264 = sbr.rel (%p262) target = $region20
        $region19: #{tpu_custom_call.1} parent=15 // pred_region
          %s265 = sadd.s32 %s24, %s25
          %p266 = scmp.lt.s32.totalorder %s265, 0
          %s267 = scalar_select %p266, %s265, 0
          %s268 = smul.u32 2, %s267
          %p269 = scmp.lt.s32.totalorder %s23, 1
          %s270 = scalar_select %p269, %s23, 1
          %p271 = scmp.lt.s32.totalorder %s268, 1
          %s272 = scalar_select %p271, %s268, 1
          %s273 = smul.addr %s270, 2
          %s274 = sadd.s32 %s272, %s273
          %s275 = scalar_lea.vmem %s0, %s274
          %s276 = sadd.s32 %s24, %s25
          %p277 = scmp.lt.s32.totalorder %s276, 0
          %s278 = scalar_select %p277, %s276, 0
          %s279 = smul.u32 2, %s278
        $region20: #{tpu_custom_call.1} parent=15 // pred_fallthru
          _
        // Predicated region
        $region21: #{tpu_custom_call.1} parent=15 // pred_check
          %p280 = pneg %p97
        $region22: #{tpu_custom_call.1} parent=15 // pred_check_branch
          %282 = sbr.rel (%p280) target = $region24
        $region23: #{tpu_custom_call.1} parent=15 // pred_region
          %s283 = sand.u32 %s87, 1
          %s284 = scalar_lea.sflag [#allocation3], %s283
          %s285 = sand.u32 %s87, 1
          %s286 = smul.addr %s285, 8
          %s287 = scalar_lea.vmem [#allocation2], %s286
          %s288 = sadd.s32 %s24, %s25
          %p289 = scmp.lt.s32.totalorder %s288, 0
          %s290 = scalar_select %p289, %s288, 0
          %s291 = smul.u32 2, %s290
          %293 = vsyncadd %s284, 0
          %s294 = smul.addr %s23, 2
          %s295 = sadd.s32 %s291, %s294
          %s296 = smul.addr %s295, 4
          %s297 = scalar_lea.hbm %s1, %s296
          %s299 = sshll.u32 %s297, 4
          %s300 = int_to_ptr.hbm [resolvable:$true] %s299
          %s301 = sshll.u32 %s287, 4
          %s302 = int_to_ptr.vmem [resolvable:$true] %s301
          %304 = dma.hbm_to_vmem [thread:$0]  %s300, 128, %s302, %s284
        $region24: #{tpu_custom_call.1} parent=15 // pred_fallthru
          _
      $region16: #{tpu_custom_call.1} parent=5 // pred_fallthru
        _
      %p305 = scmp.le.s32.totalorder 1, %s16
      %p306 = scmp.lt.s32.totalorder %s16, 3
      %p307 = pnand %p305, %p306
      %p308 = pneg %p307
      // Predicated region
      $region25: #{tpu_custom_call.1} parent=5 // pred_check
        _
      $region26: #{tpu_custom_call.1} parent=5 // pred_check_branch
        %310 = sbr.rel (%p307) target = $region28
      $region27: #{tpu_custom_call.1} parent=5 // pred_region
        %s311 = ssub.s32 %s16, 1
        %s312 = sand.u32 %s90, 1
        %s313 = scalar_lea.sflag [#allocation3], %s312
        %s314 = sand.u32 %s90, 1
        %s315 = smul.addr %s314, 8
        %s316 = scalar_lea.vmem [#allocation2], %s315
        // Predicated region
        $region29: #{tpu_custom_call.1} parent=27 // pred_check
          %p317 = pneg %p103
        $region30: #{tpu_custom_call.1} parent=27 // pred_check_branch
          %319 = sbr.rel (%p317) target = $region32
        $region31: #{tpu_custom_call.1} parent=27 // pred_region
          %321 = dma.done %s313, 128
        $region32: #{tpu_custom_call.1} parent=27 // pred_fallthru
          _
        %s322 = sadd.s32 %s27, %s28
        %p323 = scmp.lt.s32.totalorder %s322, 0
        %s324 = scalar_select %p323, %s322, 0
        %s325 = smul.u32 2, %s324
        %p326 = scmp.lt.s32.totalorder %s26, 1
        %s327 = scalar_select %p326, %s26, 1
        %p328 = scmp.lt.s32.totalorder %s325, 1
        %s329 = scalar_select %p328, %s325, 1
        %s330 = smul.addr %s327, 2
        %s331 = sadd.s32 %s329, %s330
        %s332 = scalar_lea.vmem %s0, %s331
        %p333 = pneg %p69
        %p334 = pneg %p66
        %s335 = sand.u32 %s90, 1
        %s336 = scalar_lea.sflag [#allocation3], %s335
        %s337 = sand.u32 %s90, 1
        %s338 = smul.addr %s337, 8
        %s339 = scalar_lea.vmem [#allocation2], %s338
        %p340 = pneg %p103
        %p341 = pneg %p100
        %p342 = pneg %p131
        %p343 = pneg %p128
        %p344 = scmp.lt.s32.totalorder %s26, 1
        %s345 = scalar_select %p344, %s26, 1
        %p346 = scmp.lt.s32.totalorder %s27, 0
        %s347 = scalar_select %p346, %s27, 0
        %s348 = sadd.s32 %s347, %s345
        %s349 = smul.addr %s348, 4
        %s350 = scalar_lea.vmem %s2, %s349
        %p351 = pneg %p159
        %p352 = pneg %p156
        %p353 = scmp.lt.s32.totalorder %s26, 1
        %s354 = scalar_select %p353, %s26, 1
        %p355 = scmp.lt.s32.totalorder %s27, 0
        %s356 = scalar_select %p355, %s27, 0
        %s357 = sadd.s32 %s356, %s354
        %s358 = smul.addr %s357, 4
        %s359 = scalar_lea.vmem %s3, %s358
        %p360 = pneg %p187
        %p361 = pneg %p184
        %p362 = scmp.lt.s32.totalorder %s26, 1
        %s363 = scalar_select %p362, %s26, 1
        %p364 = scmp.lt.s32.totalorder %s27, 0
        %s365 = scalar_select %p364, %s27, 0
        %s366 = sadd.s32 %s365, %s363
        %s367 = smul.addr %s366, 4
        %s368 = scalar_lea.vmem %s4, %s367
        %p369 = pneg %p215
        %p370 = pneg %p212
        %p371 = scmp.lt.s32.totalorder %s26, 1
        %s372 = scalar_select %p371, %s26, 1
        %p373 = scmp.lt.s32.totalorder %s27, 0
        %s374 = scalar_select %p373, %s27, 0
        %s375 = sadd.s32 %s374, %s372
        %s376 = scalar_lea.vmem %s5, %s375
        %p377 = pneg %p243
        %p378 = pneg %p240
        %p379 = scmp.lt.s32.totalorder %s26, 1
        %s380 = scalar_select %p379, %s26, 1
        %p381 = scmp.lt.s32.totalorder %s27, 0
        %s382 = scalar_select %p381, %s27, 0
        %s383 = sadd.s32 %s382, %s380
        %s384 = scalar_lea.vmem %s6, %s383
        %s385 = sadd.s32 %s27, %s28
        %p386 = scmp.lt.s32.totalorder %s385, 0
        %s387 = scalar_select %p386, %s385, 0
        %s388 = smul.u32 2, %s387
        %p389 = scmp.lt.s32.totalorder %s26, 1
        %s390 = scalar_select %p389, %s26, 1
        %p391 = scmp.lt.s32.totalorder %s388, 1
        %s392 = scalar_select %p391, %s388, 1
        %s393 = smul.addr %s390, 2
        %s394 = sadd.s32 %s392, %s393
        %s395 = scalar_lea.vmem %s0, %s394
        %s396 = sadd.s32 %s27, %s28
        %p397 = scmp.lt.s32.totalorder %s396, 0
        %s398 = scalar_select %p397, %s396, 0
        %s399 = smul.u32 2, %s398
        %s400 = sadd.s32 %s27, %s28
        %p401 = scmp.lt.s32.totalorder %s400, 0
        %s402 = scalar_select %p401, %s400, 0
        %s403 = smul.u32 2, %s402
        %p404 = scmp.lt.s32.totalorder %s26, 1
        %s405 = scalar_select %p404, %s26, 1
        %p406 = scmp.lt.s32.totalorder %s27, 0
        %s407 = scalar_select %p406, %s27, 0
        %s408 = sadd.s32 %s407, %s405
        %s409 = smul.addr %s408, 4
        %s410 = scalar_lea.vmem %s2, %s409
        %p411 = scmp.lt.s32.totalorder %s26, 1
        %s412 = scalar_select %p411, %s26, 1
        %p413 = scmp.lt.s32.totalorder %s27, 0
        %s414 = scalar_select %p413, %s27, 0
        %s415 = sadd.s32 %s414, %s412
        %s416 = smul.addr %s415, 4
        %s417 = scalar_lea.vmem %s3, %s416
        %p418 = scmp.lt.s32.totalorder %s26, 1
        %s419 = scalar_select %p418, %s26, 1
        %p420 = scmp.lt.s32.totalorder %s27, 0
        %s421 = scalar_select %p420, %s27, 0
        %s422 = sadd.s32 %s421, %s419
        %s423 = smul.addr %s422, 4
        %s424 = scalar_lea.vmem %s4, %s423
        %p425 = scmp.lt.s32.totalorder %s26, 1
        %s426 = scalar_select %p425, %s26, 1
        %p427 = scmp.lt.s32.totalorder %s27, 0
        %s428 = scalar_select %p427, %s27, 0
        %s429 = sadd.s32 %s428, %s426
        %s430 = scalar_lea.vmem %s5, %s429
        %p431 = scmp.lt.s32.totalorder %s26, 1
        %s432 = scalar_select %p431, %s26, 1
        %p433 = scmp.lt.s32.totalorder %s27, 0
        %s434 = scalar_select %p433, %s27, 0
        %s435 = sadd.s32 %s434, %s432
        %s436 = scalar_lea.vmem %s6, %s435
        %p437 = scmp.eq.s32.totalorder %s28, 0
        // Predicated region
        $region33: #{tpu_custom_call.1} parent=27 // pred_check
          %p438 = pneg %p437
        $region34: #{tpu_custom_call.1} parent=27 // pred_check_branch
          %440 = sbr.rel (%p438) target = $region36
        $region35: #{tpu_custom_call.1} parent=27 // pred_region
          %vm441 = vcmask 3072
          %442 = vst.msk [vmem:[%s410] sm:$0xf] %vm441, 0.0
          %443 = vst.msk [vmem:[%s417] sm:$0xf] %vm441, 0.0
          %444 = vst.msk [vmem:[%s424] sm:$0xf] %vm441, 0.0
          %vm445 = vcmask 0
          %446 = vst.msk [vmem:[%s430] sm:$0x1] %vm445, 0.0
          %447 = vst.msk [vmem:[%s436] sm:$0x1] %vm445, 0.0
        $region36: #{tpu_custom_call.1} parent=27 // pred_fallthru
          _
        %v448 = vld [vmem:[%s395] sm:$0x3]
        %v449 = vunpack.c.0.s8 %v448
        %v450 = vand.u32 %v449, 255
        %v451 = vld [vmem:[%s316] sm:$0xff]
        %v452 = vlaneseq
        %v453 = vshrl.u32 %v452, 7
        %v454 = vperm.slane %v450, 0
        %v455 = vperm.slane %v450, 4
        %v456 = vperm.slane %v454, 0
        %v457 = vperm.slane %v455, 0
        %vm458 = vcmp.eq.s32.totalorder %v453, %v456
        %vm459 = vcmp.eq.s32.totalorder %v453, %v457
        %v460 = vld [vmem:[%s410] sm:$0xf]
        %462 = vst [vmem:[#allocation1] ss:$2 sm:$0xff] %v451
        %v463 = vld.sshfl [vmem:[#allocation1] sm:$0xff pattern:$0x75316420]
        %v464 = vld.sshfl [vmem:[#allocation1 + $0x8] sm:$0xff pattern:$0x75316420]
        %v467 = vsel %vm458, %v463, 0.0
        %v468 = vsel %vm459, %v464, 0.0
        %vm469 = vcmask 1043456
        %v470 = vsel %vm469, %v467, 0.0
        %v471 = vsel %vm469, %v468, 0.0
        %v472 = vadd.f32 %v470, %v471
        %473 = vadd.xlane.f32.xlu0 %v472
        %v474 = vpop.xlane.xlu0 %473
        %v475 = vadd.f32 %v460, %v474
        %vm476 = vcmask 3072
        %477 = vst.msk [vmem:[%s410] sm:$0xf] %vm476, %v475
        %v478 = vld [vmem:[%s417] sm:$0xf]
        %v479 = vsel %vm458, 1, 0
        %v480 = vsel %vm459, 1, 0
        %v481 = vcvt.s32.f32 %v479
        %v482 = vcvt.s32.f32 %v480
        %v483 = vsel %vm469, %v481, 0.0
        %v484 = vsel %vm469, %v482, 0.0
        %v485 = vadd.f32 %v483, %v484
        %486 = vadd.xlane.f32.xlu0 %v485
        %v487 = vpop.xlane.xlu0 %486
        %v488 = vadd.f32 %v478, %v487
        %489 = vst.msk [vmem:[%s417] sm:$0xf] %vm476, %v488
        %v490 = vld [vmem:[%s424] sm:$0xf]
        %491 = vst [vmem:[#allocation1] ss:$2 sm:$0xff] %v451
        %v492 = vld.sshfl [vmem:[#allocation1] sm:$0xff pattern:$0x75316420]
        %v493 = vld.sshfl [vmem:[#allocation1 + $0x8] sm:$0xff pattern:$0x75316420]
        %v496 = vsel %vm469, %v492, 0.0
        %v497 = vsel %vm469, %v493, 0.0
        %v498 = vadd.f32 %v496, %v497
        %499 = vadd.xlane.f32.xlu0 %v498
        %v500 = vpop.xlane.xlu0 %499
        %v501 = vadd.f32 %v490, %v500
        %502 = vst.msk [vmem:[%s424] sm:$0xf] %vm476, %v501
        %vm503 = vcmp.ne.s32.totalorder %v450, 255
        %504 = vst [vmem:[#allocation1] ss:$2 sm:$0xff] %v451
        %v505 = vld.sshfl [vmem:[#allocation1] sm:$0xff pattern:$0x75316420]
        %v506 = vld.sshfl [vmem:[#allocation1 + $0x8] sm:$0xff pattern:$0x75316420]
        %v509 = vsel %vm469, %v505, -inf
        %v510 = vrot.slane %v509, 4
        %v511 = vmax.f32 %v509, %v510
        %v512 = vrot.slane %v511, 2
        %v513 = vmax.f32 %v511, %v512
        %v514 = vrot.slane %v513, 1
        %v515 = vmax.f32 %v513, %v514
        %v516 = vsel %vm469, %v506, -inf
        %v517 = vrot.slane %v516, 4
        %v518 = vmax.f32 %v516, %v517
        %v519 = vrot.slane %v518, 2
        %v520 = vmax.f32 %v518, %v519
        %v521 = vrot.slane %v520, 1
        %v522 = vmax.f32 %v520, %v521
        %v525 = vrot.slane %v522, 4
        %v526 = vsel %vm469, %v515, %v525
        %v528 = vsub.f32 %v451, %v526
        %v529 = vmul.f32 %v528, 1.442695
        %v530 = vpow.pop %v529
        %532 = vst [vmem:[#allocation1] ss:$2 sm:$0xff] %v530
        %v533 = vld.sshfl [vmem:[#allocation1] sm:$0xff pattern:$0x75316420]
        %v534 = vld.sshfl [vmem:[#allocation1 + $0x8] sm:$0xff pattern:$0x75316420]
        %v537 = vsel %vm469, %v533, 0.0
        %v538 = vrot.slane %v537, 4
        %v539 = vadd.f32 %v537, %v538
        %v540 = vrot.slane %v539, 2
        %v541 = vadd.f32 %v539, %v540
        %v542 = vrot.slane %v541, 1
        %v543 = vadd.f32 %v541, %v542
        %v544 = vsel %vm469, %v534, 0.0
        %v545 = vrot.slane %v544, 4
        %v546 = vadd.f32 %v544, %v545
        %v547 = vrot.slane %v546, 2
        %v548 = vadd.f32 %v546, %v547
        %v549 = vrot.slane %v548, 1
        %v550 = vadd.f32 %v548, %v549
        %v551 = vlog2.pop %v543
        %v552 = vmul.f32 %v551, 0.6931472
        %v553 = vlog2.pop %v550
        %v554 = vmul.f32 %v553, 0.6931472
        %v555 = vadd.f32 %v515, %v552
        %v556 = vadd.f32 %v522, %v554
        %v557 = vld [vmem:[%s430] sm:$0x1]
        %v560 = vrot.slane %v556, 4
        %v561 = vsel %vm469, %v555, %v560
        %v563 = vsel %vm503, %v561, 0.0
        %v565 = vperm.slane %v563, 0
        %v566 = vperm.slane %v563, 4
        %vm569 = vcmask 1040384
        %v570 = vsel %vm569, %v565, 0.0
        %v571 = vsel %vm569, %v566, 0.0
        %v572 = vadd.f32 %v570, %v571
        %573 = vadd.xlane.f32.xlu0 %v572
        %v574 = vpop.xlane.xlu0 %573
        %v575 = vadd.f32 %v557, %v574
        %vm576 = vcmask 0
        %577 = vst.msk [vmem:[%s430] sm:$0x1] %vm576, %v575
        %v578 = vld [vmem:[%s436] sm:$0x1]
        %v579 = vsel %vm503, 1, 0
        %v580 = vcvt.s32.f32 %v579
        %v582 = vperm.slane %v580, 0
        %v583 = vperm.slane %v580, 4
        %v586 = vsel %vm569, %v582, 0.0
        %v587 = vsel %vm569, %v583, 0.0
        %v588 = vadd.f32 %v586, %v587
        %589 = vadd.xlane.f32.xlu0 %v588
        %v590 = vpop.xlane.xlu0 %589
        %v591 = vadd.f32 %v578, %v590
        %592 = vst.msk [vmem:[%s436] sm:$0x1] %vm576, %v591
        %p593 = scmp.lt.s32.totalorder %s26, 1
        %s594 = scalar_select %p593, %s26, 1
        %p595 = scmp.lt.s32.totalorder %s27, 0
        %s596 = scalar_select %p595, %s27, 0
        %s597 = sadd.s32 %s596, %s594
        %s598 = smul.addr %s597, 4
        %s599 = scalar_lea.vmem %s2, %s598
        %p600 = scmp.lt.s32.totalorder %s26, 1
        %s601 = scalar_select %p600, %s26, 1
        %p602 = scmp.lt.s32.totalorder %s27, 0
        %s603 = scalar_select %p602, %s27, 0
        %s604 = sadd.s32 %s603, %s601
        %s605 = smul.addr %s604, 4
        %s606 = scalar_lea.vmem %s3, %s605
        %p607 = scmp.lt.s32.totalorder %s26, 1
        %s608 = scalar_select %p607, %s26, 1
        %p609 = scmp.lt.s32.totalorder %s27, 0
        %s610 = scalar_select %p609, %s27, 0
        %s611 = sadd.s32 %s610, %s608
        %s612 = smul.addr %s611, 4
        %s613 = scalar_lea.vmem %s4, %s612
        %p614 = scmp.lt.s32.totalorder %s26, 1
        %s615 = scalar_select %p614, %s26, 1
        %p616 = scmp.lt.s32.totalorder %s27, 0
        %s617 = scalar_select %p616, %s27, 0
        %s618 = sadd.s32 %s617, %s615
        %s619 = scalar_lea.vmem %s5, %s618
        %p620 = scmp.lt.s32.totalorder %s26, 1
        %s621 = scalar_select %p620, %s26, 1
        %p622 = scmp.lt.s32.totalorder %s27, 0
        %s623 = scalar_select %p622, %s27, 0
        %s624 = sadd.s32 %s623, %s621
        %s625 = scalar_lea.vmem %s6, %s624
        // Predicated region
        $region37: #{tpu_custom_call.1} parent=27 // pred_check
          %p626 = pneg %p128
        $region38: #{tpu_custom_call.1} parent=27 // pred_check_branch
          %628 = sbr.rel (%p626) target = $region40
        $region39: #{tpu_custom_call.1} parent=27 // pred_region
          _
        $region40: #{tpu_custom_call.1} parent=27 // pred_fallthru
          _
        // Predicated region
        $region41: #{tpu_custom_call.1} parent=27 // pred_check
          %p629 = pneg %p156
        $region42: #{tpu_custom_call.1} parent=27 // pred_check_branch
          %631 = sbr.rel (%p629) target = $region44
        $region43: #{tpu_custom_call.1} parent=27 // pred_region
          _
        $region44: #{tpu_custom_call.1} parent=27 // pred_fallthru
          _
        // Predicated region
        $region45: #{tpu_custom_call.1} parent=27 // pred_check
          %p632 = pneg %p184
        $region46: #{tpu_custom_call.1} parent=27 // pred_check_branch
          %634 = sbr.rel (%p632) target = $region48
        $region47: #{tpu_custom_call.1} parent=27 // pred_region
          _
        $region48: #{tpu_custom_call.1} parent=27 // pred_fallthru
          _
        // Predicated region
        $region49: #{tpu_custom_call.1} parent=27 // pred_check
          %p635 = pneg %p212
        $region50: #{tpu_custom_call.1} parent=27 // pred_check_branch
          %637 = sbr.rel (%p635) target = $region52
        $region51: #{tpu_custom_call.1} parent=27 // pred_region
          _
        $region52: #{tpu_custom_call.1} parent=27 // pred_fallthru
          _
        // Predicated region
        $region53: #{tpu_custom_call.1} parent=27 // pred_check
          %p638 = pneg %p240
        $region54: #{tpu_custom_call.1} parent=27 // pred_check_branch
          %640 = sbr.rel (%p638) target = $region56
        $region55: #{tpu_custom_call.1} parent=27 // pred_region
          _
        $region56: #{tpu_custom_call.1} parent=27 // pred_fallthru
          _
      $region28: #{tpu_custom_call.1} parent=5 // pred_fallthru
        _
      %p641 = scmp.le.s32.totalorder 2, %s16
      // Predicated region
      $region57: #{tpu_custom_call.1} parent=5 // pred_check
        %p642 = pneg %p641
      $region58: #{tpu_custom_call.1} parent=5 // pred_check_branch
        %644 = sbr.rel (%p642) target = $region60
      $region59: #{tpu_custom_call.1} parent=5 // pred_region
        %s645 = ssub.s32 %s16, 2
        // Predicated region
        $region61: #{tpu_custom_call.1} parent=59 // pred_check
          %p646 = pneg %p134
        $region62: #{tpu_custom_call.1} parent=59 // pred_check_branch
          %648 = sbr.rel (%p646) target = $region64
        $region63: #{tpu_custom_call.1} parent=59 // pred_region
          %p649 = scmp.lt.s32.totalorder %s29, 1
          %s650 = scalar_select %p649, %s29, 1
          %p651 = scmp.lt.s32.totalorder %s30, 0
          %s652 = scalar_select %p651, %s30, 0
          %s653 = sadd.s32 %s652, %s650
          %s654 = smul.addr %s653, 4
          %s655 = scalar_lea.vmem %s2, %s654
        $region64: #{tpu_custom_call.1} parent=59 // pred_fallthru
          _
        // Predicated region
        $region65: #{tpu_custom_call.1} parent=59 // pred_check
          %p656 = pneg %p162
        $region66: #{tpu_custom_call.1} parent=59 // pred_check_branch
          %658 = sbr.rel (%p656) target = $region68
        $region67: #{tpu_custom_call.1} parent=59 // pred_region
          %p659 = scmp.lt.s32.totalorder %s29, 1
          %s660 = scalar_select %p659, %s29, 1
          %p661 = scmp.lt.s32.totalorder %s30, 0
          %s662 = scalar_select %p661, %s30, 0
          %s663 = sadd.s32 %s662, %s660
          %s664 = smul.addr %s663, 4
          %s665 = scalar_lea.vmem %s3, %s664
        $region68: #{tpu_custom_call.1} parent=59 // pred_fallthru
          _
        // Predicated region
        $region69: #{tpu_custom_call.1} parent=59 // pred_check
          %p666 = pneg %p190
        $region70: #{tpu_custom_call.1} parent=59 // pred_check_branch
          %668 = sbr.rel (%p666) target = $region72
        $region71: #{tpu_custom_call.1} parent=59 // pred_region
          %p669 = scmp.lt.s32.totalorder %s29, 1
          %s670 = scalar_select %p669, %s29, 1
          %p671 = scmp.lt.s32.totalorder %s30, 0
          %s672 = scalar_select %p671, %s30, 0
          %s673 = sadd.s32 %s672, %s670
          %s674 = smul.addr %s673, 4
          %s675 = scalar_lea.vmem %s4, %s674
        $region72: #{tpu_custom_call.1} parent=59 // pred_fallthru
          _
        // Predicated region
        $region73: #{tpu_custom_call.1} parent=59 // pred_check
          %p676 = pneg %p218
        $region74: #{tpu_custom_call.1} parent=59 // pred_check_branch
          %678 = sbr.rel (%p676) target = $region76
        $region75: #{tpu_custom_call.1} parent=59 // pred_region
          %p679 = scmp.lt.s32.totalorder %s29, 1
          %s680 = scalar_select %p679, %s29, 1
          %p681 = scmp.lt.s32.totalorder %s30, 0
          %s682 = scalar_select %p681, %s30, 0
          %s683 = sadd.s32 %s682, %s680
          %s684 = scalar_lea.vmem %s5, %s683
        $region76: #{tpu_custom_call.1} parent=59 // pred_fallthru
          _
        // Predicated region
        $region77: #{tpu_custom_call.1} parent=59 // pred_check
          %p685 = pneg %p246
        $region78: #{tpu_custom_call.1} parent=59 // pred_check_branch
          %687 = sbr.rel (%p685) target = $region80
        $region79: #{tpu_custom_call.1} parent=59 // pred_region
          %p688 = scmp.lt.s32.totalorder %s29, 1
          %s689 = scalar_select %p688, %s29, 1
          %p690 = scmp.lt.s32.totalorder %s30, 0
          %s691 = scalar_select %p690, %s30, 0
          %s692 = sadd.s32 %s691, %s689
          %s693 = scalar_lea.vmem %s6, %s692
        $region80: #{tpu_custom_call.1} parent=59 // pred_fallthru
          _
      $region60: #{tpu_custom_call.1} parent=5 // pred_fallthru
        _
    $region6: #{tpu_custom_call.1} parent=1 // loop_footer
      %s20 = sadd.s32 1, %s16
    $region7: #{tpu_custom_call.1} parent=1 // loop_footer_branch
      %15 = sbr.rel target = $region3
    $region8: #{tpu_custom_call.1} parent=1 // loop_exit
      _
    %694 = vsyncpa [#allocation3], 1
    %s695 = scalar_lea.sflag [#allocation3], 1
    %696 = vsyncpa %s695, 1

</llo_original>
